<compile_context>
chip_gen: v7x
topology: tpu7x:2x2x1
jax: 0.10.0
libtpu: 0.0.40
codegen_flags: <defaults>
</compile_context>

<pallas_src>
import functools

import jax
import jax.numpy as jnp
from jax import lax
from jax.experimental import pallas as pl
from jax.experimental.pallas import tpu as pltpu

TEMPERATURE = 0.1                      # stands in for args.temperature
_EPS_NORM_SQ = 1e-24                   # (F.normalize eps = 1e-12)^2 on the sum-of-squares
_TINY_F32 = 1.1754943508222875e-38     # torch.finfo(f32).tiny — used only by the reference
_LANE = 128


def _round_up(x, m):
    return (x + m - 1) // m * m


def _vmem_capacity_bytes():
    # Per-generation VMEM (v5e/v6e: 128 MiB, v7x: 64 MiB).  Falls back conservatively
    # when no TPU is attached (e.g. interpret mode on CPU, where the value is unused).
    try:
        info = pltpu.get_tpu_info()
        cap = int(getattr(info, "vmem_capacity_bytes", 0))
        if cap > 0:
            return cap
    except Exception:
        pass
    return 64 * 1024 * 1024


def _choose_tiles(n_pad, eb, budget):
    """Pick (row_tile, col_chunk) for pass 2 from the VMEM budget."""
    tm_cands = [t for t in (1024, 512, 256, 128) if n_pad % t == 0] or [n_pad]
    tk_cands = [t for t in (512, 256, 128) if n_pad % t == 0] or [n_pad]
    # Prefer >= 2 row tiles so the "parallel" axis can spread across megacore / v7x's 2 TCs.
    pref = [t for t in tm_cands if n_pad // t >= 2] or tm_cands

    def footprint(tm, tk):
        sim_acc = tm * n_pad * 4            # f32 accumulator scratch
        emb_chunk = 2 * n_pad * tk * eb     # double-buffered (N, tk) emb chunk
        epilogue = 2 * tm * n_pad * 4       # headroom for exp/log/mask temporaries
        return sim_acc + emb_chunk + epilogue

    for tm in pref:
        for tk in tk_cands:
            if footprint(tm, tk) <= budget:
                return tm, tk
    return tm_cands[-1], tk_cands[-1]


def _embed_kernel(fn_ref, emb_ref, *, tm):
    # fn_ref: (n_pad, D) pre-normalized features (compute dtype); constant block index,
    # so Pallas keeps it resident instead of re-fetching every step.
    row_start = pl.program_id(0) * tm
    fn_all = fn_ref[...]                                   # (n_pad, D)
    fn_tile = fn_ref[pl.ds(row_start, tm), :]              # (tm, D) — slice of same block

    # gram[i_tile, :] = fn_tile @ fn_all.T  (contract last-with-last -> MXU, f32 accumulate)
    # `/ temperature` intentionally omitted — it cancels in the row L2-normalization below.
    gram = lax.dot_general(fn_tile, fn_all, (((1,), (1,)), ((), ())),
                           preferred_element_type=jnp.float32)        # (tm, n_pad) f32

    inv_norm = lax.rsqrt(jnp.maximum(jnp.sum(gram * gram, axis=1, keepdims=True),
                                     _EPS_NORM_SQ))
    emb_ref[...] = (gram * inv_norm).astype(emb_ref.dtype)


def _loss_kernel(emb_ref, lab_col_ref, lab_row_ref, loss_ref, cnt_ref, sim_acc,
                 *, tm, n_valid, inv_t):
    # NOTE: all pl.program_id / pl.num_programs calls must stay at the kernel top level
    # (they are not lowered inside pl.when branches under interpret mode).
    k = pl.program_id(1)
    nk = pl.num_programs(1)
    row_start = pl.program_id(0) * tm

    emb_all = emb_ref[...]                                 # (n_pad, tk)
    emb_row = emb_ref[pl.ds(row_start, tm), :]             # (tm, tk) — reuse resident block

    # sim[i_tile, :] += emb[i_tile, k_chunk] @ emb[:, k_chunk].T   (q.kT pattern, f32 acc)
    partial = lax.dot_general(emb_row, emb_all, (((1,), (1,)), ((), ())),
                              preferred_element_type=jnp.float32)     # (tm, n_pad)

    @pl.when(k == 0)
    def _():
        sim_acc[...] = partial

    @pl.when(k > 0)
    def _():
        sim_acc[...] += partial

    @pl.when(k == nk - 1)
    def _():
        sim = sim_acc[...] * inv_t                                    # (tm, n_pad) f32
        n_pad = sim.shape[1]

        lab_i = lab_col_ref[...]                                      # (tm, 1) int32
        lab_all = lab_row_ref[...]                                    # (1, n_pad) int32
        same = lab_i == lab_all                                       # (tm, n_pad)

        row_g = row_start + lax.broadcasted_iota(jnp.int32, (tm, 1), 0)   # (tm, 1)
        col_g = lax.broadcasted_iota(jnp.int32, (1, n_pad), 1)            # (1, n_pad)
        col_valid = col_g < n_valid
        pos_mask = same & (row_g != col_g) & (row_g < n_valid) & col_valid
        neg_mask = (~same) & col_valid

        # Per-anchor max / sum-exp over negatives.
        neg_max = jnp.max(jnp.where(neg_mask, sim, -1e30), axis=1, keepdims=True)
        has_neg = jnp.any(neg_mask, axis=1, keepdims=True)
        neg_max = jnp.where(has_neg, neg_max, 0.0)                    # keep exp() finite

        # Single-exp NTXent epilogue (safe: |sim| <= 1/T so sim - neg_max <= 2/T):
        #   loss = -log( e / (e + sum_neg) ) = log(e + sum_neg) - (sim - neg_max)
        e = jnp.exp(sim - neg_max)                                    # one (tm, n_pad) exp
        neg_sumexp = jnp.sum(jnp.where(neg_mask, e, 0.0), axis=1, keepdims=True)
        loss_mat = jnp.log(e + neg_sumexp) - (sim - neg_max)

        loss_ref[...] = jnp.sum(jnp.where(pos_mask, loss_mat, 0.0),
                                axis=1, keepdims=True)                # (tm, 1)
        cnt_ref[...] = jnp.sum(pos_mask.astype(jnp.float32),
                               axis=1, keepdims=True)                 # (tm, 1)


def supervised_contrastive_loss(feature_vectors, labels, *, temperature=TEMPERATURE,
                                use_bf16=True, row_tile=None, col_tile=None):
    n, d = feature_vectors.shape
    feats = feature_vectors.astype(jnp.float32)
    lab = jnp.squeeze(labels).astype(jnp.int32).reshape(n)

    # F.normalize(x, p=2, dim=1) done ONCE in the wrapper (trivial O(N*D) XLA op).
    fn = feats * lax.rsqrt(jnp.maximum(jnp.sum(feats * feats, axis=1, keepdims=True),
                                       _EPS_NORM_SQ))

    # Pad N to a lane-aligned multiple of 128; padded rows/cols are masked in-kernel
    # (padded emb rows are exactly zero, so they never pollute sums or denominators).
    n_pad = max(_LANE, _round_up(n, _LANE))
    if n_pad != n:
        fn = jnp.pad(fn, ((0, n_pad - n), (0, 0)))
        lab = jnp.pad(lab, (0, n_pad - n), constant_values=-1)

    compute_dtype = jnp.bfloat16 if use_bf16 else jnp.float32
    eb = 2 if use_bf16 else 4
    fn = fn.astype(compute_dtype)
    lab_col = lab.reshape(n_pad, 1)
    lab_row = lab.reshape(1, n_pad)

    vmem_cap = _vmem_capacity_bytes()
    vmem_limit = int(vmem_cap * 0.85)
    tm, tk = _choose_tiles(n_pad, eb, int(vmem_cap * 0.75))
    if row_tile is not None:
        tm = row_tile
    if col_tile is not None:
        tk = col_tile
    assert n_pad % tm == 0 and n_pad % tk == 0, "row_tile/col_tile must divide padded N"

    # ---- Pass 1: emb (N_pad, N_pad), tiled over anchor rows (parallel / megacore) ------
    emb = pl.pallas_call(
        functools.partial(_embed_kernel, tm=tm),
        out_shape=jax.ShapeDtypeStruct((n_pad, n_pad), compute_dtype),
        grid_spec=pltpu.PrefetchScalarGridSpec(
            num_scalar_prefetch=0,
            grid=(n_pad // tm,),
            in_specs=[pl.BlockSpec((n_pad, d), lambda i: (0, 0))],
            out_specs=pl.BlockSpec((tm, n_pad), lambda i: (i, 0))),
        compiler_params=pltpu.CompilerParams(
            dimension_semantics=("parallel",),
            vmem_limit_bytes=vmem_limit),
        cost_estimate=pl.CostEstimate(
            flops=int(2 * n_pad * n_pad * d + 3 * n_pad * n_pad),
            transcendentals=int(n_pad),
            bytes_accessed=int(n_pad * d * eb + n_pad * n_pad * eb)),
    )(fn)

    # ---- Pass 2: flash-style loss, grid = (row tiles [parallel], col chunks [reduce]) ---
    inv_t = 1.0 / float(temperature)
    loss_sums, counts = pl.pallas_call(
        functools.partial(_loss_kernel, tm=tm, n_valid=n, inv_t=inv_t),
        out_shape=(jax.ShapeDtypeStruct((n_pad, 1), jnp.float32),
                   jax.ShapeDtypeStruct((n_pad, 1), jnp.float32)),
        grid_spec=pltpu.PrefetchScalarGridSpec(
            num_scalar_prefetch=0,
            grid=(n_pad // tm, n_pad // tk),
            in_specs=[pl.BlockSpec((n_pad, tk), lambda i, k: (0, k)),    # emb column chunk
                      pl.BlockSpec((tm, 1), lambda i, k: (i, 0)),        # labels (anchors)
                      pl.BlockSpec((1, n_pad), lambda i, k: (0, 0))],    # labels (lane row)
            out_specs=[pl.BlockSpec((tm, 1), lambda i, k: (i, 0)),
                       pl.BlockSpec((tm, 1), lambda i, k: (i, 0))],
            scratch_shapes=[pltpu.VMEM((tm, n_pad), jnp.float32)]),
        compiler_params=pltpu.CompilerParams(
            dimension_semantics=("parallel", "arbitrary"),
            vmem_limit_bytes=vmem_limit),
        cost_estimate=pl.CostEstimate(
            flops=int(2 * n_pad * n_pad * n_pad + 12 * n_pad * n_pad),
            transcendentals=int(2 * n_pad * n_pad),
            bytes_accessed=int(n_pad * n_pad * eb * (n_pad // tm) + 2 * n_pad * 4)),
    )(emb, lab_col, lab_row)

    # MeanReducer over ordered positive pairs (tiny scalar epilogue outside the kernels).
    return jnp.sum(loss_sums) / jnp.maximum(jnp.sum(counts), 1.0)


def _reference(feature_vectors, labels):
    # Pure-JAX mirror of the original PyTorch math (keeps the /T and the tiny clamp).
    f = feature_vectors.astype(jnp.float32)
    fn = f / jnp.maximum(jnp.sqrt(jnp.sum(f * f, axis=1, keepdims=True)), 1e-12)
    logits = (fn @ fn.T) / TEMPERATURE
    emb = logits / jnp.maximum(jnp.sqrt(jnp.sum(logits * logits, axis=1, keepdims=True)), 1e-12)
    sim = (emb @ emb.T) / TEMPERATURE
    lab = jnp.squeeze(labels).astype(jnp.int32)
    n = lab.shape[0]
    same = lab[:, None] == lab[None, :]
    diag = jnp.eye(n, dtype=bool)
    pos_mask = same & ~diag
    neg_mask = ~same
    neg_sim = jnp.where(neg_mask, sim, -1e30)
    neg_max = jnp.max(neg_sim, axis=1, keepdims=True)
    has_neg = jnp.any(neg_mask, axis=1, keepdims=True)
    neg_sumexp = jnp.sum(jnp.where(neg_mask, jnp.exp(sim - neg_max), 0.0), axis=1, keepdims=True)
    max_val = jnp.maximum(sim, neg_max)
    numer = jnp.exp(sim - max_val)
    denom = numer + jnp.where(has_neg, jnp.exp(neg_max - max_val) * neg_sumexp, 0.0)
    loss_mat = -jnp.log(numer / denom + _TINY_F32)
    posf = pos_mask.astype(jnp.float32)
    return jnp.sum(loss_mat * posf) / jnp.maximum(jnp.sum(posf), 1.0)


if __name__ == "__main__":
    key = jax.random.PRNGKey(0)
    N, D = 8, 32
    feats = jax.random.normal(key, (N, D), dtype=jnp.float32)
    labels = jnp.array([0, 0, 1, 1, 0, 1, 0, 1], dtype=jnp.int32).reshape(N, 1)

    ref = _reference(feats, labels)

    # Default path: bf16 MXU operands / bf16 emb storage, f32 accumulation + epilogue.
    loss_bf16 = jax.block_until_ready(supervised_contrastive_loss(feats, labels))
    assert jnp.isfinite(loss_bf16), "bf16 loss is not finite"
    assert jnp.allclose(loss_bf16, ref, rtol=2e-1, atol=1e-1), (loss_bf16, ref)

    # f32 operand path (tighter check; tolerance allows for MXU f32 pass decomposition).
    loss_f32 = jax.block_until_ready(
        supervised_contrastive_loss(feats, labels, use_bf16=False))
    assert jnp.isfinite(loss_f32), "f32 loss is not finite"
    assert jnp.allclose(loss_f32, ref, rtol=1e-2, atol=1e-2), (loss_f32, ref)

    print("KERNEL_OK")
</pallas_src>

<mosaic_0001>
module attributes {stable_mosaic.version = 11 : i64} {
  func.func @_embed_kernel(%arg0: i32, %arg1: memref<128x32xbf16, #tpu.memory_space<vmem>>, %arg2: memref<128x128xbf16, #tpu.memory_space<vmem>>) attributes {dimension_semantics = [#tpu.dimension_semantics<parallel>], iteration_bounds = array<i64: 1>, scalar_prefetch = 0 : i64, scratch_operands = 0 : i64, tpu.core_type = #tpu.core_type<tc>, window_params = [{pipeline_mode = #tpu.pipeline_mode<synchronous>, transform_indices = @transform_0, window_bounds = array<i64: 128, 32>}, {transform_indices = @transform_1, window_bounds = array<i64: 128, 128>}]} {
    %c128_i32 = arith.constant 128 : i32
    %0 = arith.muli %arg0, %c128_i32 : i32
    %c0 = arith.constant 0 : index
    %c0_0 = arith.constant 0 : index
    %1 = vector.load %arg1[%c0, %c0_0] : memref<128x32xbf16, #tpu.memory_space<vmem>>, vector<128x32xbf16>
    %2 = arith.index_cast %0 : i32 to index
    %c0_1 = arith.constant 0 : index
    %3 = vector.load %arg1[%2, %c0_1] : memref<128x32xbf16, #tpu.memory_space<vmem>>, vector<128x32xbf16>
    %cst = arith.constant dense<0.000000e+00> : vector<128x128xf32>
    %4 = tpu.matmul %3, %1, %cst {dimension_numbers = #tpu.dot_dimension_numbers<[1], [1], [0], [0], [0, 0, 1, 0], [], []>} : vector<128x32xbf16>, vector<128x32xbf16>, vector<128x128xf32> -> vector<128x128xf32>
    %5 = arith.mulf %4, %4 : vector<128x128xf32>
    %cst_2 = arith.constant dense<0.000000e+00> : vector<128xf32>
    %6 = vector.multi_reduction <add>, %5, %cst_2 [1] : vector<128x128xf32> to vector<128xf32>
    %7 = vector.shape_cast %6 : vector<128xf32> to vector<128x1xf32>
    %cst_3 = arith.constant 1.000000e-24 : f32
    %8 = vector.broadcast %cst_3 : f32 to vector<128x1xf32>
    %9 = arith.maximumf %7, %8 : vector<128x1xf32>
    %10 = math.rsqrt %9 : vector<128x1xf32>
    %11 = vector.broadcast %10 : vector<128x1xf32> to vector<128x128xf32>
    %12 = arith.mulf %4, %11 : vector<128x128xf32>
    %13 = arith.truncf %12 : vector<128x128xf32> to vector<128x128xbf16>
    %c0_4 = arith.constant 0 : index
    %c0_5 = arith.constant 0 : index
    %14 = vector.load %arg2[%c0_4, %c0_5] : memref<128x128xbf16, #tpu.memory_space<vmem>>, vector<128x128xbf16>
    tpu.vector_store %arg2[%c0_4, %c0_5], %13 {strides = array<i32>} : memref<128x128xbf16, #tpu.memory_space<vmem>>, vector<128x128xbf16>,
    return
  }
  func.func @transform_0(%arg0: i32) -> (i32, i32) {
    %c0_i32 = arith.constant 0 : i32
    %c0_i32_0 = arith.constant 0 : i32
    %c0_i32_1 = arith.constant 0 : i32
    return %c0_i32, %c0_i32_0 : i32, i32
  }
  func.func @transform_1(%arg0: i32) -> (i32, i32) {
    %c0_i32 = arith.constant 0 : i32
    %c0_i32_0 = arith.constant 0 : i32
    return %arg0, %c0_i32 : i32, i32
  }
}

</mosaic_0001>

<llo_original>
// kernel: tpu_custom_call.1
$region0: #{tpu_custom_call.1}
  #allocation0 [shape = 'u32[]', space=smem, size = 0x4, offset = 0x4, fixed_abs, tag = 'smem constant byte address 0x4 - core index']
  #allocation1 [shape = 'u32[144,128]{1,0:T(1,128)}', space=vmem, size = 0x12000, scoped, tag = 'internal scratch']
  %s0 = inlined_call_operand.vmem [shape: bf16[128,32], index: 0, kind: input, shape index: {}]
  %s1 = inlined_call_operand.hbm [shape: bf16[128,128], index: 1, kind: output, shape index: {}]
  %s2 = sld [smem:[#allocation0]]
  $region14: #{tpu_custom_call.1} parent=0
    _
  %s4 = ssub.s32 1, %s2
  %s5 = scalar_select 0, %s4, %s2
  $region1: #{tpu_custom_call.1} parent=0
    #allocation2 [shape = 'u8[32768]{0}', space=vmem, size = 0x8000, scoped, tag = 'output window, operand 0, single buffered']
    #allocation3 [shape = 's32[1]{0}', space=sflag, size = 0x4, scoped, tag = 'scoped memory for tpu_custom_call.1']
    %6 = vsyncpa [#allocation3], 0
    // Predicated region
    $region2: #{tpu_custom_call.1} parent=1 // pred_check
      _
    $region3: #{tpu_custom_call.1} parent=1 // pred_check_branch
      %8 = sbr.rel (0) target = $region5
    $region4: #{tpu_custom_call.1} parent=1 // pred_region
      _
    $region5: #{tpu_custom_call.1} parent=1 // pred_fallthru
      _
    %s10 = smul.u32 0, 128
    %v11 = vld [vmem:[%s0] sm:$0xf]
    %v12 = vld [vmem:[%s0 + $0x4] sm:$0xf]
    %v13 = vld [vmem:[%s0 + $0x8] sm:$0xf]
    %v14 = vld [vmem:[%s0 + $0xc] sm:$0xf]
    %v15 = vld [vmem:[%s0 + $0x10] sm:$0xf]
    %v16 = vld [vmem:[%s0 + $0x14] sm:$0xf]
    %v17 = vld [vmem:[%s0 + $0x18] sm:$0xf]
    %v18 = vld [vmem:[%s0 + $0x1c] sm:$0xf]
    %v19 = vld [vmem:[%s0 + $0x20] sm:$0xf]
    %v20 = vld [vmem:[%s0 + $0x24] sm:$0xf]
    %v21 = vld [vmem:[%s0 + $0x28] sm:$0xf]
    %v22 = vld [vmem:[%s0 + $0x2c] sm:$0xf]
    %v23 = vld [vmem:[%s0 + $0x30] sm:$0xf]
    %v24 = vld [vmem:[%s0 + $0x34] sm:$0xf]
    %v25 = vld [vmem:[%s0 + $0x38] sm:$0xf]
    %v26 = vld [vmem:[%s0 + $0x3c] sm:$0xf]
    %s27 = sshra.s32 %s10, 3
    %s28 = sand.u32 %s10, 7
    %s29 = smul.addr %s27, 4
    %s30 = scalar_lea.vmem %s0, %s29
    %v31 = vld [vmem:[%s30] sm:$0xf]
    %v32 = vld [vmem:[%s30 + $0x4] sm:$0xf]
    %v33 = vld [vmem:[%s30 + $0x8] sm:$0xf]
    %v34 = vld [vmem:[%s30 + $0xc] sm:$0xf]
    %v35 = vld [vmem:[%s30 + $0x10] sm:$0xf]
    %v36 = vld [vmem:[%s30 + $0x14] sm:$0xf]
    %v37 = vld [vmem:[%s30 + $0x18] sm:$0xf]
    %v38 = vld [vmem:[%s30 + $0x1c] sm:$0xf]
    %v39 = vld [vmem:[%s30 + $0x20] sm:$0xf]
    %v40 = vld [vmem:[%s30 + $0x24] sm:$0xf]
    %v41 = vld [vmem:[%s30 + $0x28] sm:$0xf]
    %v42 = vld [vmem:[%s30 + $0x2c] sm:$0xf]
    %v43 = vld [vmem:[%s30 + $0x30] sm:$0xf]
    %v44 = vld [vmem:[%s30 + $0x34] sm:$0xf]
    %v45 = vld [vmem:[%s30 + $0x38] sm:$0xf]
    %v46 = vld [vmem:[%s30 + $0x3c] sm:$0xf]
    %v63 = vunpack.c.l.b16 %v31
    %v64 = vunpack.c.l.b16 %v32
    %v65 = vunpack.c.l.b16 %v33
    %v66 = vunpack.c.l.b16 %v34
    %v67 = vunpack.c.l.b16 %v35
    %v68 = vunpack.c.l.b16 %v36
    %v69 = vunpack.c.l.b16 %v37
    %v70 = vunpack.c.l.b16 %v38
    %v71 = vunpack.c.l.b16 %v39
    %v72 = vunpack.c.l.b16 %v40
    %v73 = vunpack.c.l.b16 %v41
    %v74 = vunpack.c.l.b16 %v42
    %v75 = vunpack.c.l.b16 %v43
    %v76 = vunpack.c.l.b16 %v44
    %v77 = vunpack.c.l.b16 %v45
    %v78 = vunpack.c.l.b16 %v46
    %v79 = vpack.c.b16 %v64, %v63
    %v80 = vpack.c.b16 %v66, %v65
    %v81 = vpack.c.b16 %v68, %v67
    %v82 = vpack.c.b16 %v70, %v69
    %v83 = vpack.c.b16 %v72, %v71
    %v84 = vpack.c.b16 %v74, %v73
    %v85 = vpack.c.b16 %v76, %v75
    %v86 = vpack.c.b16 %v78, %v77
    %v103 = vunpack.c.l.b16 %v11
    %v104 = vunpack.c.l.b16 %v12
    %v105 = vunpack.c.l.b16 %v13
    %v106 = vunpack.c.l.b16 %v14
    %v107 = vunpack.c.l.b16 %v15
    %v108 = vunpack.c.l.b16 %v16
    %v109 = vunpack.c.l.b16 %v17
    %v110 = vunpack.c.l.b16 %v18
    %v111 = vunpack.c.l.b16 %v19
    %v112 = vunpack.c.l.b16 %v20
    %v113 = vunpack.c.l.b16 %v21
    %v114 = vunpack.c.l.b16 %v22
    %v115 = vunpack.c.l.b16 %v23
    %v116 = vunpack.c.l.b16 %v24
    %v117 = vunpack.c.l.b16 %v25
    %v118 = vunpack.c.l.b16 %v26
    %v119 = vpack.c.b16 %v104, %v103
    %v120 = vpack.c.b16 %v106, %v105
    %v121 = vpack.c.b16 %v108, %v107
    %v122 = vpack.c.b16 %v110, %v109
    %v123 = vpack.c.b16 %v112, %v111
    %v124 = vpack.c.b16 %v114, %v113
    %v125 = vpack.c.b16 %v116, %v115
    %v126 = vpack.c.b16 %v118, %v117
    %vm127 = vcmask 261120
    %v129 = vsel %vm127, %v79, 0
    %v132 = vsel %vm127, %v80, 0
    %v135 = vsel %vm127, %v81, 0
    %v138 = vsel %vm127, %v82, 0
    %v141 = vsel %vm127, %v83, 0
    %v144 = vsel %vm127, %v84, 0
    %v147 = vsel %vm127, %v85, 0
    %v150 = vsel %vm127, %v86, 0
    %v153 = vsel %vm127, %v119, 0
    %v156 = vsel %vm127, %v120, 0
    %v159 = vsel %vm127, %v121, 0
    %v162 = vsel %vm127, %v122, 0
    %v165 = vsel %vm127, %v123, 0
    %v168 = vsel %vm127, %v124, 0
    %v171 = vsel %vm127, %v125, 0
    %v174 = vsel %vm127, %v126, 0
    %176 = vmatprep.subr.bf16.mxu0 0
    %177 = vmatpush1.bf16.xpose.msra.mxu0 %v153
    %178 = vmatprep.subr.bf16.mxu0 0
    %179 = vmatpush1.bf16.xpose.msra.mxu0 %v156
    %180 = vmatprep.subr.bf16.mxu0 0
    %181 = vmatpush1.bf16.xpose.msra.mxu0 %v159
    %182 = vmatprep.subr.bf16.mxu0 0
    %183 = vmatpush1.bf16.xpose.msra.mxu0 %v162
    %184 = vmatprep.subr.bf16.mxu0 0
    %185 = vmatpush1.bf16.xpose.msra.mxu0 %v165
    %186 = vmatprep.subr.bf16.mxu0 0
    %187 = vmatpush1.bf16.xpose.msra.mxu0 %v168
    %188 = vmatprep.subr.bf16.mxu0 0
    %189 = vmatpush1.bf16.xpose.msra.mxu0 %v171
    %190 = vmatprep.subr.bf16.mxu0 0
    %191 = vmatpush1.bf16.xpose.msra.mxu0 %v174
    %192 = vmatprep.subr.bf16.mxu0 0
    %193 = vmatpush1.bf16.xpose.msra.mxu0 0
    %194 = vmatprep.subr.bf16.mxu0 0
    %195 = vmatpush1.bf16.xpose.msra.mxu0 0
    %196 = vmatprep.subr.bf16.mxu0 0
    %197 = vmatpush1.bf16.xpose.msra.mxu0 0
    %198 = vmatprep.subr.bf16.mxu0 0
    %199 = vmatpush1.bf16.xpose.msra.mxu0 0
    %200 = vmatprep.subr.bf16.mxu0 0
    %201 = vmatpush1.bf16.xpose.msra.mxu0 0
    %202 = vmatprep.subr.bf16.mxu0 0
    %203 = vmatpush1.bf16.xpose.msra.mxu0 0
    %204 = vmatprep.subr.bf16.mxu0 0
    %205 = vmatpush1.bf16.xpose.msra.mxu0 0
    %206 = vmatprep.subr.bf16.mxu0 0
    %207 = vmatpush1.bf16.xpose.msra.mxu0 0
    %208 = vmatprep.mubr.bf16.mxu0 0
    %209 = vmatmul.mubr.bf16.gmra.mrb[0].mxu0 %v129
    %v210 = vpop.f32.mrb[0].mxu0
    %v211 = vadd.f32 0.0, %v210
    %v212 = vpop.f32.mrb[0].mxu0
    %v213 = vpop.f32.mrb[0].mxu0
    %v214 = vadd.f32 0.0, %v213
    %v215 = vpop.f32.mrb[0].mxu0
    %216 = vmatprep.mubr.bf16.mxu0 0
    %217 = vmatmul.mubr.bf16.gmra.mrb[0].mxu0 %v132
    %v218 = vpop.f32.mrb[0].mxu0
    %v219 = vadd.f32 0.0, %v218
    %v220 = vpop.f32.mrb[0].mxu0
    %v221 = vpop.f32.mrb[0].mxu0
    %v222 = vadd.f32 0.0, %v221
    %v223 = vpop.f32.mrb[0].mxu0
    %224 = vmatprep.mubr.bf16.mxu0 0
    %225 = vmatmul.mubr.bf16.gmra.mrb[0].mxu0 %v135
    %v226 = vpop.f32.mrb[0].mxu0
    %v227 = vadd.f32 0.0, %v226
    %v228 = vpop.f32.mrb[0].mxu0
    %v229 = vpop.f32.mrb[0].mxu0
    %v230 = vadd.f32 0.0, %v229
    %v231 = vpop.f32.mrb[0].mxu0
    %232 = vmatprep.mubr.bf16.mxu0 0
    %233 = vmatmul.mubr.bf16.gmra.mrb[0].mxu0 %v138
    %v234 = vpop.f32.mrb[0].mxu0
    %v235 = vadd.f32 0.0, %v234
    %v236 = vpop.f32.mrb[0].mxu0
    %v237 = vpop.f32.mrb[0].mxu0
    %v238 = vadd.f32 0.0, %v237
    %v239 = vpop.f32.mrb[0].mxu0
    %240 = vmatprep.mubr.bf16.mxu0 0
    %241 = vmatmul.mubr.bf16.gmra.mrb[0].mxu0 %v141
    %v242 = vpop.f32.mrb[0].mxu0
    %v243 = vadd.f32 0.0, %v242
    %v244 = vpop.f32.mrb[0].mxu0
    %v245 = vpop.f32.mrb[0].mxu0
    %v246 = vadd.f32 0.0, %v245
    %v247 = vpop.f32.mrb[0].mxu0
    %248 = vmatprep.mubr.bf16.mxu0 0
    %249 = vmatmul.mubr.bf16.gmra.mrb[0].mxu0 %v144
    %v250 = vpop.f32.mrb[0].mxu0
    %v251 = vadd.f32 0.0, %v250
    %v252 = vpop.f32.mrb[0].mxu0
    %v253 = vpop.f32.mrb[0].mxu0
    %v254 = vadd.f32 0.0, %v253
    %v255 = vpop.f32.mrb[0].mxu0
    %256 = vmatprep.mubr.bf16.mxu0 0
    %257 = vmatmul.mubr.bf16.gmra.mrb[0].mxu0 %v147
    %v258 = vpop.f32.mrb[0].mxu0
    %v259 = vadd.f32 0.0, %v258
    %v260 = vpop.f32.mrb[0].mxu0
    %v261 = vpop.f32.mrb[0].mxu0
    %v262 = vadd.f32 0.0, %v261
    %v263 = vpop.f32.mrb[0].mxu0
    %264 = vmatprep.mubr.bf16.mxu0 0
    %265 = vmatmul.mubr.bf16.gmra.mrb[0].mxu0 %v150
    %v266 = vpop.f32.mrb[0].mxu0
    %v267 = vadd.f32 0.0, %v266
    %v268 = vpop.f32.mrb[0].mxu0
    %v269 = vpop.f32.mrb[0].mxu0
    %v270 = vadd.f32 0.0, %v269
    %v271 = vpop.f32.mrb[0].mxu0
    %272 = vdwg.mxu0
    %v273 = vmul.f32 %v211, %v211
    %v274 = vmul.f32 %v214, %v214
    %v275 = vmul.f32 %v219, %v219
    %v276 = vmul.f32 %v222, %v222
    %v277 = vmul.f32 %v227, %v227
    %v278 = vmul.f32 %v230, %v230
    %v279 = vmul.f32 %v235, %v235
    %v280 = vmul.f32 %v238, %v238
    %v281 = vmul.f32 %v243, %v243
    %v282 = vmul.f32 %v246, %v246
    %v283 = vmul.f32 %v251, %v251
    %v284 = vmul.f32 %v254, %v254
    %v285 = vmul.f32 %v259, %v259
    %v286 = vmul.f32 %v262, %v262
    %v287 = vmul.f32 %v267, %v267
    %v288 = vmul.f32 %v270, %v270
    %289 = vadd.xlane.f32.xlu0 %v273
    %v290 = vpop.xlane.xlu0 %289
    %291 = vadd.xlane.f32.xlu0 %v274
    %v292 = vpop.xlane.xlu0 %291
    %293 = vadd.xlane.f32.xlu0 %v275
    %v294 = vpop.xlane.xlu0 %293
    %295 = vadd.xlane.f32.xlu0 %v276
    %v296 = vpop.xlane.xlu0 %295
    %297 = vadd.xlane.f32.xlu0 %v277
    %v298 = vpop.xlane.xlu0 %297
    %299 = vadd.xlane.f32.xlu0 %v278
    %v300 = vpop.xlane.xlu0 %299
    %301 = vadd.xlane.f32.xlu0 %v279
    %v302 = vpop.xlane.xlu0 %301
    %303 = vadd.xlane.f32.xlu0 %v280
    %v304 = vpop.xlane.xlu0 %303
    %305 = vadd.xlane.f32.xlu0 %v281
    %v306 = vpop.xlane.xlu0 %305
    %307 = vadd.xlane.f32.xlu0 %v282
    %v308 = vpop.xlane.xlu0 %307
    %309 = vadd.xlane.f32.xlu0 %v283
    %v310 = vpop.xlane.xlu0 %309
    %311 = vadd.xlane.f32.xlu0 %v284
    %v312 = vpop.xlane.xlu0 %311
    %313 = vadd.xlane.f32.xlu0 %v285
    %v314 = vpop.xlane.xlu0 %313
    %315 = vadd.xlane.f32.xlu0 %v286
    %v316 = vpop.xlane.xlu0 %315
    %317 = vadd.xlane.f32.xlu0 %v287
    %v318 = vpop.xlane.xlu0 %317
    %319 = vadd.xlane.f32.xlu0 %v288
    %v320 = vpop.xlane.xlu0 %319
    %v321 = vmax.f32 %v290, 1e-24
    %v322 = vmax.f32 %v292, 1e-24
    %v323 = vmax.f32 %v294, 1e-24
    %v324 = vmax.f32 %v296, 1e-24
    %v325 = vmax.f32 %v298, 1e-24
    %v326 = vmax.f32 %v300, 1e-24
    %v327 = vmax.f32 %v302, 1e-24
    %v328 = vmax.f32 %v304, 1e-24
    %v329 = vmax.f32 %v306, 1e-24
    %v330 = vmax.f32 %v308, 1e-24
    %v331 = vmax.f32 %v310, 1e-24
    %v332 = vmax.f32 %v312, 1e-24
    %v333 = vmax.f32 %v314, 1e-24
    %v334 = vmax.f32 %v316, 1e-24
    %v335 = vmax.f32 %v318, 1e-24
    %v336 = vmax.f32 %v320, 1e-24
    %v337 = vrsqrt.pop %v321
    %v338 = vrsqrt.pop %v322
    %v339 = vrsqrt.pop %v323
    %v340 = vrsqrt.pop %v324
    %v341 = vrsqrt.pop %v325
    %v342 = vrsqrt.pop %v326
    %v343 = vrsqrt.pop %v327
    %v344 = vrsqrt.pop %v328
    %v345 = vrsqrt.pop %v329
    %v346 = vrsqrt.pop %v330
    %v347 = vrsqrt.pop %v331
    %v348 = vrsqrt.pop %v332
    %v349 = vrsqrt.pop %v333
    %v350 = vrsqrt.pop %v334
    %v351 = vrsqrt.pop %v335
    %v352 = vrsqrt.pop %v336
    %v353 = vmul.f32 %v211, %v337
    %v354 = vmul.f32 %v214, %v338
    %v355 = vmul.f32 %v219, %v339
    %v356 = vmul.f32 %v222, %v340
    %v357 = vmul.f32 %v227, %v341
    %v358 = vmul.f32 %v230, %v342
    %v359 = vmul.f32 %v235, %v343
    %v360 = vmul.f32 %v238, %v344
    %v361 = vmul.f32 %v243, %v345
    %v362 = vmul.f32 %v246, %v346
    %v363 = vmul.f32 %v251, %v347
    %v364 = vmul.f32 %v254, %v348
    %v365 = vmul.f32 %v259, %v349
    %v366 = vmul.f32 %v262, %v350
    %v367 = vmul.f32 %v267, %v351
    %v368 = vmul.f32 %v270, %v352
    %v369 = vpack.c.bf16 %v354, %v353
    %v370 = vpack.c.bf16 %v356, %v355
    %v371 = vpack.c.bf16 %v358, %v357
    %v372 = vpack.c.bf16 %v360, %v359
    %v373 = vpack.c.bf16 %v362, %v361
    %v374 = vpack.c.bf16 %v364, %v363
    %v375 = vpack.c.bf16 %v366, %v365
    %v376 = vpack.c.bf16 %v368, %v367
    %v385 = vunpack.c.l.b16 %v369
    %v386 = vunpack.c.h.b16 %v369
    %v387 = vunpack.c.l.b16 %v370
    %v388 = vunpack.c.h.b16 %v370
    %v389 = vunpack.c.l.b16 %v371
    %v390 = vunpack.c.h.b16 %v371
    %v391 = vunpack.c.l.b16 %v372
    %v392 = vunpack.c.h.b16 %v372
    %v393 = vunpack.c.l.b16 %v373
    %v394 = vunpack.c.h.b16 %v373
    %v395 = vunpack.c.l.b16 %v374
    %v396 = vunpack.c.h.b16 %v374
    %v397 = vunpack.c.l.b16 %v375
    %v398 = vunpack.c.h.b16 %v375
    %v399 = vunpack.c.l.b16 %v376
    %v400 = vunpack.c.h.b16 %v376
    %v401 = vpack.c.b16 %v385, %v385
    %v402 = vpack.c.b16 %v386, %v386
    %v403 = vpack.c.b16 %v387, %v387
    %v404 = vpack.c.b16 %v388, %v388
    %v405 = vpack.c.b16 %v389, %v389
    %v406 = vpack.c.b16 %v390, %v390
    %v407 = vpack.c.b16 %v391, %v391
    %v408 = vpack.c.b16 %v392, %v392
    %v409 = vpack.c.b16 %v393, %v393
    %v410 = vpack.c.b16 %v394, %v394
    %v411 = vpack.c.b16 %v395, %v395
    %v412 = vpack.c.b16 %v396, %v396
    %v413 = vpack.c.b16 %v397, %v397
    %v414 = vpack.c.b16 %v398, %v398
    %v415 = vpack.c.b16 %v399, %v399
    %v416 = vpack.c.b16 %v400, %v400
    %433 = vst [vmem:[#allocation2] sm:$0xf] %v401
    %434 = vst [vmem:[#allocation2 + $0x4] sm:$0xf] %v402
    %435 = vst [vmem:[#allocation2 + $0x8] sm:$0xf] %v403
    %436 = vst [vmem:[#allocation2 + $0xc] sm:$0xf] %v404
    %437 = vst [vmem:[#allocation2 + $0x10] sm:$0xf] %v405
    %438 = vst [vmem:[#allocation2 + $0x14] sm:$0xf] %v406
    %439 = vst [vmem:[#allocation2 + $0x18] sm:$0xf] %v407
    %440 = vst [vmem:[#allocation2 + $0x1c] sm:$0xf] %v408
    %441 = vst [vmem:[#allocation2 + $0x20] sm:$0xf] %v409
    %442 = vst [vmem:[#allocation2 + $0x24] sm:$0xf] %v410
    %443 = vst [vmem:[#allocation2 + $0x28] sm:$0xf] %v411
    %444 = vst [vmem:[#allocation2 + $0x2c] sm:$0xf] %v412
    %445 = vst [vmem:[#allocation2 + $0x30] sm:$0xf] %v413
    %446 = vst [vmem:[#allocation2 + $0x34] sm:$0xf] %v414
    %447 = vst [vmem:[#allocation2 + $0x38] sm:$0xf] %v415
    %448 = vst [vmem:[#allocation2 + $0x3c] sm:$0xf] %v416
    // Predicated region
    $region6: #{tpu_custom_call.1} parent=1 // pred_check
      _
    $region7: #{tpu_custom_call.1} parent=1 // pred_check_branch
      %450 = sbr.rel (0) target = $region9
    $region8: #{tpu_custom_call.1} parent=1 // pred_region
      %s452 = ssub.s32 1024, 1024
      %453 = vsyncadd [#allocation3], %s452
      %s454 = sshll.u32 [#allocation2], 4
      %s455 = int_to_ptr.vmem [resolvable:$true] %s454
      %460 = dma.vmem_to_hbm [thread:$0]  %s455, 1024, %s1, [#allocation3], 64, 64, 4
    $region9: #{tpu_custom_call.1} parent=1 // pred_fallthru
      _
    // Predicated region
    $region10: #{tpu_custom_call.1} parent=1 // pred_check
      _
    $region11: #{tpu_custom_call.1} parent=1 // pred_check_branch
      %462 = sbr.rel (0) target = $region13
    $region12: #{tpu_custom_call.1} parent=1 // pred_region
      %463 = dma.done [#allocation3], 1024
    $region13: #{tpu_custom_call.1} parent=1 // pred_fallthru
      _
    %464 = vsyncpa [#allocation3], 1

</llo_original>
